<compile_context>
chip_gen: v7x
topology: tpu7x:2x2x1
jax: 0.10.0
libtpu: 0.0.40
codegen_flags: <defaults>
</compile_context>

<pallas_src>
import collections
import math

import numpy as np
import jax
import jax.numpy as jnp
from jax import lax
from jax.experimental import pallas as pl
from jax.experimental.pallas import tpu as pltpu

# ---- module hyper-parameters (from CFA.__init__: s=50.0, m=0.2) -------------
S = 50.0
M = 0.2
COS_M = math.cos(M)
SIN_M = math.sin(M)
TH = math.cos(math.pi - M)
MM = math.sin(math.pi - M) * M
EPS = 1e-08
LOG_EPS = math.log(EPS)
NORM_EPS = 1e-12          # F.normalize default eps
S_SIN_M = S * SIN_M       # folded constants (save VPU multiplies)
S_MM = S * MM


def _round_up(x, m):
    return ((x + m - 1) // m) * m


def _vmem_capacity_bytes():
    try:
        cap = getattr(pltpu.get_tpu_info(), "vmem_capacity_bytes", None)
        if cap:
            return int(cap)
    except Exception:
        pass
    return 64 * 2 ** 20   # conservative (v7x per-TensorCore VMEM)


def _prefers_tm256():
    # v6e: 2x256^2 MXU and 128 MiB VMEM -> 256-row LHS blocks pay off.
    try:
        kind = jax.devices()[0].device_kind.lower()
    except Exception:
        return False
    return ("v6" in kind) and _vmem_capacity_bytes() >= (96 << 20)


# ------------------------------ Pallas kernel --------------------------------
def cfa_kernel(n_ref, img_ref, txt_ref, labc_ref, labr_ref, logm_ref, out_ref):
    """One grid step = one TM-row block of the grouped batch.

    n_ref    : SMEM (1,) int32        -- number of valid (non-padded) rows/cols
    img_ref  : VMEM (N_pad, D) bf16   -- pre-L2-normalized image feats (resident)
    txt_ref  : VMEM (N_pad, D) bf16   -- pre-L2-normalized text feats (resident)
    labc_ref : VMEM (TM, 1) int32     -- this row block's labels
    labr_ref : VMEM (1, N_pad) int32  -- all labels (resident)
    logm_ref : VMEM (1, N_pad) f32    -- log(1/||mask col j|| + eps) (resident)
    out_ref  : VMEM (1, 1, N_pad) f32 -- partial column sums of (i2t+t2i) loss
    """
    i = pl.program_id(0)
    tm = labc_ref.shape[0]
    n_pad = img_ref.shape[0]
    n_valid = n_ref[0]

    row0 = pl.multiple_of(i * tm, tm)

    # Normalization/bf16 cast hoisted to the wrapper -> pure reads here.
    img_all = img_ref[...]                                  # (N_pad, D) bf16
    txt_all = txt_ref[...]
    img_blk = img_ref[pl.ds(row0, tm), :]                   # (TM, D) bf16
    txt_blk = txt_ref[pl.ds(row0, tm), :]

    # Rebuild log(labels_mask_norm + eps) in-kernel (no N^2 HBM input):
    # same label -> log(1/||mask col j|| + eps), otherwise log(eps).  Exact.
    match = labc_ref[...] == labr_ref[...]                  # (TM, N_pad) bool
    log_mask = jnp.where(match,
                         jnp.broadcast_to(logm_ref[...], (tm, n_pad)),
                         LOG_EPS)

    # Validity masks for padded columns / rows.
    col_ids = lax.broadcasted_iota(jnp.int32, (tm, n_pad), 1)
    col_valid = (col_ids < n_valid).astype(jnp.float32)
    row_ids = lax.broadcasted_iota(jnp.int32, (tm, n_pad), 0) + row0
    row_valid = (row_ids < n_valid).astype(jnp.float32)

    dn = (((1,), (1,)), ((), ()))   # contract the feature dim of both operands

    def directional_loss(cos):
        # cos: (TM, N_pad) f32 rows of this direction's cosine matrix.
        cs = cos * S                                             # reused below
        sine = jnp.sqrt(jnp.maximum(1.0 - cos * cos, 0.0))       # NaN guard
        z = jnp.where(cos > TH, cs * COS_M - sine * S_SIN_M, cs - S_MM)  # phi*s
        e = jnp.exp(cs) * col_valid
        sum_e = jnp.sum(e, axis=1, keepdims=True) - e
        top = jnp.exp(z)
        denom = top + sum_e
        thetas = z - jnp.log(denom)            # log(top/(top+sum_e)), no -inf
        p = top * pl.reciprocal(denom, approx=True) * col_valid  # exp(thetas)
        sum_p = jnp.sum(p, axis=1, keepdims=True)
        pred = p * pl.reciprocal(sum_p, approx=True)             # softmax
        log_pred = thetas - jnp.log(sum_p)                       # log_softmax
        return pred * (log_pred - log_mask)                      # (TM, N_pad)

    cos_i2t = lax.dot_general(img_blk, txt_all, dn,
                              preferred_element_type=jnp.float32)
    cos_t2i = lax.dot_general(txt_blk, img_all, dn,
                              preferred_element_type=jnp.float32)

    total = (directional_loss(cos_i2t) + directional_loss(cos_t2i)) * row_valid
    # Lane-dense write: partial column sums for this block (padded rows masked,
    # padded columns contribute exactly 0); the wrapper only needs the total.
    out_ref[0] = jnp.sum(total, axis=0, keepdims=True)


# ------------------------------ pallas_call wrapper --------------------------
def cfa_loss_pallas(img_n, txt_n, labels_col, labels_row, log_match, n_valid, tm):
    """img_n/txt_n: (N_pad, D) bf16 pre-normalized; labels_col: (N_pad, 1) i32;
    labels_row: (1, N_pad) i32; log_match: (1, N_pad) f32.  Returns scalar loss."""
    n_pad, d = img_n.shape
    nb = n_pad // tm

    # VMEM budget: resident bf16 inputs + ~26 live (TM, N_pad) f32 temporaries
    # + small blocks, clamped below the chip's physical VMEM minus headroom.
    est = (2 * n_pad * d * 2 * 2        # img/txt bf16 (x2 in case Buffered(1) ignored)
           + 26 * tm * n_pad * 4        # elementwise temporaries
           + 4 * tm * d * 2             # LHS row-block slices
           + 12 * n_pad * 4             # labels / log_match / output blocks
           + (1 << 20))
    cap = _vmem_capacity_bytes()
    ceiling = max(cap - (8 << 20), 16 << 20)
    vmem_limit = int(min(max(est, 16 << 20), ceiling))

    def build(single_buffer_resident):
        res_kw = ({"pipeline_mode": pl.Buffered(1)}
                  if single_buffer_resident else {})
        grid_spec = pltpu.PrefetchScalarGridSpec(
            num_scalar_prefetch=1,
            grid=(nb,),
            in_specs=[
                pl.BlockSpec((n_pad, d), lambda i, n: (0, 0), **res_kw),  # img
                pl.BlockSpec((n_pad, d), lambda i, n: (0, 0), **res_kw),  # txt
                pl.BlockSpec((tm, 1), lambda i, n: (i, 0)),        # block labels
                pl.BlockSpec((1, n_pad), lambda i, n: (0, 0)),     # all labels
                pl.BlockSpec((1, n_pad), lambda i, n: (0, 0)),     # log(1/norm+eps)
            ],
            out_specs=pl.BlockSpec((1, 1, n_pad), lambda i, n: (i, 0, 0)),
        )
        return pl.pallas_call(
            cfa_kernel,
            out_shape=jax.ShapeDtypeStruct((nb, 1, n_pad), jnp.float32),
            grid_spec=grid_spec,
            compiler_params=pltpu.CompilerParams(
                dimension_semantics=("parallel",),
                vmem_limit_bytes=vmem_limit),
        )

    n_arr = jnp.asarray([n_valid], dtype=jnp.int32)
    args = (n_arr, img_n, txt_n, labels_col, labels_row, log_match)
    try:
        out = build(True)(*args)
    except Exception:
        # TODO(synk): pl.Buffered(1) not accepted by this JAX build for a
        # top-level pallas_call BlockSpec; fall back to default buffering.
        out = build(False)(*args)

    # Tiny O(nb*N) finalize in the wrapper: mean over the valid rows.
    return jnp.sum(out) / n_valid


# ------------------------------ host-side glue -------------------------------
def group_by_label(img, txt, labels):
    """defaultdict grouping + per-class mean (data-dependent shape -> host)."""
    img = np.asarray(img)
    txt = np.asarray(txt)
    labels = np.asarray(labels)
    groups = collections.OrderedDict()
    for idx, lab in enumerate(labels):
        groups.setdefault(int(lab), []).append(idx)
    new_img, new_txt, new_labels = [], [], []
    for lab, idxs in groups.items():
        new_labels.append(lab)
        if len(idxs) > 1:
            new_img.append(img[idxs].mean(axis=0))
            new_txt.append(txt[idxs].mean(axis=0))
        else:
            new_img.append(img[idxs[0]])
            new_txt.append(txt[idxs[0]])
    return (np.stack(new_img).astype(np.float32),
            np.stack(new_txt).astype(np.float32),
            np.asarray(new_labels, dtype=np.int64))


def label_mask_norm(labels):
    """labels_mask.float() / labels_mask.float().norm(dim=1) (reference only)."""
    lab = np.asarray(labels).reshape(-1, 1)
    mask = ((lab - lab.T) == 0).astype(np.float32)
    row_norm = np.linalg.norm(mask, axis=1)
    return (mask / row_norm[None, :]).astype(np.float32)


def _l2_normalize(x):
    nrm = jnp.sqrt(jnp.sum(x * x, axis=-1, keepdims=True))
    return x / jnp.maximum(nrm, NORM_EPS)


def _choose_tm(n, d, vmem_cap):
    if n <= 128:
        # small batch: a single block, aligned to bf16 sublane packing (>=16).
        return _round_up(max(n, 16), 16)
    n_pad128 = _round_up(n, 128)
    resident = 2 * n_pad128 * d * 2                      # bf16 img+txt
    budget = int(vmem_cap * 0.8) - resident
    tm = 256 if _prefers_tm256() else 128
    # shrink until the (TM, N) elementwise temporaries fit (v7x: 64 MiB VMEM).
    while tm > 16 and 26 * tm * n_pad128 * 4 > budget:
        tm //= 2
    # keep >= 2 row blocks so the "parallel" axis can split across TensorCores.
    while tm > 16 and _round_up(n, tm) // tm < 2:
        tm //= 2
    return max(tm, 16)


def cfa_forward(input_img, input_text, labels, tm=None):
    g_img, g_txt, g_lab = group_by_label(input_img, input_text, labels)
    n, d = g_img.shape

    # Per-column log(1/||mask row j|| + eps).  (After grouping the labels are
    # unique so the mask is the identity, but keep the general formula.)
    lab = g_lab.reshape(-1, 1)
    mask = (lab == lab.T).astype(np.float32)
    col_norm = np.linalg.norm(mask, axis=1)
    log_match = np.log(1.0 / col_norm + EPS).astype(np.float32)

    cap = _vmem_capacity_bytes()
    if tm is None:
        tm = _choose_tm(n, d, cap)
    n_pad = _round_up(max(n, tm), tm)

    img_pad = np.zeros((n_pad, d), np.float32)
    txt_pad = np.zeros((n_pad, d), np.float32)
    lab_pad = np.full((n_pad,), -1, np.int32)
    lm_pad = np.full((n_pad,), LOG_EPS, np.float32)
    img_pad[:n] = g_img
    txt_pad[:n] = g_txt
    lab_pad[:n] = g_lab.astype(np.int32)
    lm_pad[:n] = log_match

    # L2-normalize ONCE (hoisted out of the kernel), cast to bf16 for the MXU.
    img_n = _l2_normalize(jnp.asarray(img_pad)).astype(jnp.bfloat16)
    txt_n = _l2_normalize(jnp.asarray(txt_pad)).astype(jnp.bfloat16)

    return cfa_loss_pallas(
        img_n, txt_n,
        jnp.asarray(lab_pad.reshape(n_pad, 1)),
        jnp.asarray(lab_pad.reshape(1, n_pad)),
        jnp.asarray(lm_pad.reshape(1, n_pad)),
        n, tm)


# pure-JAX reference (same math as the torch module, f32) for sanity checking
def cfa_reference(g_img, g_txt, mask_norm):
    log_mask = jnp.log(mask_norm + EPS)

    def l2n(x):
        return x / jnp.maximum(jnp.linalg.norm(x, axis=-1, keepdims=True),
                               NORM_EPS)

    def dloss(cos):
        sine = jnp.sqrt(jnp.maximum(1.0 - cos * cos, 0.0))
        phi = jnp.where(cos > TH, cos * COS_M - sine * SIN_M, cos - MM)
        e = jnp.exp(cos * S)
        sum_e = jnp.sum(e, axis=1, keepdims=True) - e
        top = jnp.exp(phi * S)
        thetas = jnp.log(top / (top + sum_e))
        pred = jax.nn.softmax(thetas, axis=1)
        logp = jax.nn.log_softmax(thetas, axis=1)
        return jnp.mean(jnp.sum(pred * (logp - log_mask), axis=1))

    a, b = l2n(g_img), l2n(g_txt)
    c = jnp.dot(a, b.T, precision=lax.Precision.HIGHEST)
    return dloss(c) + dloss(c.T)


if __name__ == "__main__":
    key = jax.random.PRNGKey(0)
    k1, k2, k3, k4 = jax.random.split(key, 4)
    D = 256                            # small feature dim (module default 2048)

    # --- case 1: tiny batch with duplicate labels (single row block) ---------
    B1 = 8
    img1 = jax.random.normal(k1, (B1, D), dtype=jnp.float32)
    txt1 = jax.random.normal(k2, (B1, D), dtype=jnp.float32)
    lab1 = jnp.array([0, 1, 2, 0, 3, 1, 4, 5], dtype=jnp.int32)

    loss1 = jax.block_until_ready(cfa_forward(img1, txt1, lab1))
    gi1, gt1, gl1 = group_by_label(img1, txt1, lab1)
    ref1 = jax.block_until_ready(
        cfa_reference(jnp.asarray(gi1), jnp.asarray(gt1),
                      jnp.asarray(label_mask_norm(gl1))))
    np.testing.assert_allclose(np.asarray(loss1), np.asarray(ref1),
                               rtol=2e-2, atol=2e-2)
    assert np.isfinite(np.asarray(loss1))

    # --- case 2: multi-block grid (tm=16, 20 unique labels, padded rows/cols) -
    B2 = 40
    img2 = jax.random.normal(k3, (B2, D), dtype=jnp.float32)
    txt2 = jax.random.normal(k4, (B2, D), dtype=jnp.float32)
    lab2 = jnp.arange(B2, dtype=jnp.int32) % 20    # 20 groups of 2

    loss2 = jax.block_until_ready(cfa_forward(img2, txt2, lab2, tm=16))
    gi2, gt2, gl2 = group_by_label(img2, txt2, lab2)
    ref2 = jax.block_until_ready(
        cfa_reference(jnp.asarray(gi2), jnp.asarray(gt2),
                      jnp.asarray(label_mask_norm(gl2))))
    np.testing.assert_allclose(np.asarray(loss2), np.asarray(ref2),
                               rtol=2e-2, atol=2e-2)
    assert np.isfinite(np.asarray(loss2))

    print("KERNEL_OK")
</pallas_src>

<mosaic_0001>
module attributes {stable_mosaic.version = 11 : i64} {
  func.func @cfa_kernel(%arg0: i32, %arg1: memref<1xi32, #tpu.memory_space<smem>>, %arg2: memref<16x256xbf16, #tpu.memory_space<vmem>>, %arg3: memref<16x256xbf16, #tpu.memory_space<vmem>>, %arg4: memref<16x1xi32, #tpu.memory_space<vmem>>, %arg5: memref<1x16xi32, #tpu.memory_space<vmem>>, %arg6: memref<1x16xf32, #tpu.memory_space<vmem>>, %arg7: memref<1x1x16xf32, #tpu.memory_space<vmem>>) attributes {dimension_semantics = [#tpu.dimension_semantics<parallel>], iteration_bounds = array<i64: 1>, scalar_prefetch = 1 : i64, scratch_operands = 0 : i64, tpu.core_type = #tpu.core_type<tc>, window_params = [{pipeline_mode = #tpu.pipeline_mode<synchronous>, transform_indices = @transform_0, window_bounds = array<i64: 16, 256>}, {pipeline_mode = #tpu.pipeline_mode<synchronous>, transform_indices = @transform_1, window_bounds = array<i64: 16, 256>}, {transform_indices = @transform_2, window_bounds = array<i64: 16, 1>}, {pipeline_mode = #tpu.pipeline_mode<synchronous>, transform_indices = @transform_3, window_bounds = array<i64: 1, 16>}, {pipeline_mode = #tpu.pipeline_mode<synchronous>, transform_indices = @transform_4, window_bounds = array<i64: 1, 16>}, {transform_indices = @transform_5, window_bounds = array<i64: 1, 1, 16>}]} {
    %c0 = arith.constant 0 : index
    %0 = memref.load %arg1[%c0] : memref<1xi32, #tpu.memory_space<smem>>
    %c16_i32 = arith.constant 16 : i32
    %1 = arith.muli %arg0, %c16_i32 : i32
    %2 = tpu.assume_multiple %1, 16 : i32
    %c0_0 = arith.constant 0 : index
    %c0_1 = arith.constant 0 : index
    %3 = vector.load %arg2[%c0_0, %c0_1] : memref<16x256xbf16, #tpu.memory_space<vmem>>, vector<16x256xbf16>
    %c0_2 = arith.constant 0 : index
    %c0_3 = arith.constant 0 : index
    %4 = vector.load %arg3[%c0_2, %c0_3] : memref<16x256xbf16, #tpu.memory_space<vmem>>, vector<16x256xbf16>
    %5 = arith.index_cast %2 : i32 to index
    %c0_4 = arith.constant 0 : index
    %6 = vector.load %arg2[%5, %c0_4] : memref<16x256xbf16, #tpu.memory_space<vmem>>, vector<16x256xbf16>
    %7 = arith.index_cast %2 : i32 to index
    %c0_5 = arith.constant 0 : index
    %8 = vector.load %arg3[%7, %c0_5] : memref<16x256xbf16, #tpu.memory_space<vmem>>, vector<16x256xbf16>
    %c0_6 = arith.constant 0 : index
    %c0_7 = arith.constant 0 : index
    %9 = vector.load %arg4[%c0_6, %c0_7] : memref<16x1xi32, #tpu.memory_space<vmem>>, vector<16x1xi32>
    %c0_8 = arith.constant 0 : index
    %c0_9 = arith.constant 0 : index
    %10 = vector.load %arg5[%c0_8, %c0_9] : memref<1x16xi32, #tpu.memory_space<vmem>>, vector<1x16xi32>
    %11 = vector.broadcast %9 : vector<16x1xi32> to vector<16x16xi32>
    %12 = vector.broadcast %10 : vector<1x16xi32> to vector<16x16xi32>
    %13 = arith.cmpi eq, %11, %12 : vector<16x16xi32>
    %c0_10 = arith.constant 0 : index
    %c0_11 = arith.constant 0 : index
    %14 = vector.load %arg6[%c0_10, %c0_11] : memref<1x16xf32, #tpu.memory_space<vmem>>, vector<1x16xf32>
    %15 = vector.shape_cast %14 : vector<1x16xf32> to vector<1x16xf32>
    %16 = vector.broadcast %15 : vector<1x16xf32> to vector<16x16xf32>
    %cst = arith.constant -18.420681 : f32
    %17 = vector.broadcast %cst : f32 to vector<16x16xf32>
    %18 = arith.select %13, %16, %17 : vector<16x16xi1>, vector<16x16xf32>
    %19 = tpu.iota {dimensions = array<i32: 1>} : vector<16x16xi32>
    %20 = vector.broadcast %0 : i32 to vector<16x16xi32>
    %21 = arith.cmpi slt, %19, %20 : vector<16x16xi32>
    %22 = arith.extui %21 : vector<16x16xi1> to vector<16x16xi32>
    %23 = arith.sitofp %22 : vector<16x16xi32> to vector<16x16xf32>
    %24 = tpu.iota {dimensions = array<i32: 0>} : vector<16x16xi32>
    %25 = vector.broadcast %2 : i32 to vector<16x16xi32>
    %26 = arith.addi %24, %25 : vector<16x16xi32>
    %27 = vector.broadcast %0 : i32 to vector<16x16xi32>
    %28 = arith.cmpi slt, %26, %27 : vector<16x16xi32>
    %29 = arith.extui %28 : vector<16x16xi1> to vector<16x16xi32>
    %30 = arith.sitofp %29 : vector<16x16xi32> to vector<16x16xf32>
    %cst_12 = arith.constant dense<0.000000e+00> : vector<16x16xf32>
    %31 = tpu.matmul %6, %4, %cst_12 {dimension_numbers = #tpu.dot_dimension_numbers<[1], [1], [0], [0], [0, 0, 1, 0], [], []>} : vector<16x256xbf16>, vector<16x256xbf16>, vector<16x16xf32> -> vector<16x16xf32>
    %cst_13 = arith.constant dense<0.000000e+00> : vector<16x16xf32>
    %32 = tpu.matmul %8, %3, %cst_13 {dimension_numbers = #tpu.dot_dimension_numbers<[1], [1], [0], [0], [0, 0, 1, 0], [], []>} : vector<16x256xbf16>, vector<16x256xbf16>, vector<16x16xf32> -> vector<16x16xf32>
    %cst_14 = arith.constant 5.000000e+01 : f32
    %33 = vector.broadcast %cst_14 : f32 to vector<16x16xf32>
    %34 = arith.mulf %31, %33 : vector<16x16xf32>
    %35 = arith.mulf %31, %31 : vector<16x16xf32>
    %cst_15 = arith.constant 1.000000e+00 : f32
    %36 = vector.broadcast %cst_15 : f32 to vector<16x16xf32>
    %37 = arith.subf %36, %35 : vector<16x16xf32>
    %cst_16 = arith.constant 0.000000e+00 : f32
    %38 = vector.broadcast %cst_16 : f32 to vector<16x16xf32>
    %39 = arith.maximumf %37, %38 : vector<16x16xf32>
    %40 = math.sqrt %39 : vector<16x16xf32>
    %cst_17 = arith.constant -0.980066597 : f32
    %41 = vector.broadcast %cst_17 : f32 to vector<16x16xf32>
    %42 = arith.cmpf ogt, %31, %41 : vector<16x16xf32>
    %cst_18 = arith.constant 0.980066597 : f32
    %43 = vector.broadcast %cst_18 : f32 to vector<16x16xf32>
    %44 = arith.mulf %34, %43 : vector<16x16xf32>
    %cst_19 = arith.constant 9.93346691 : f32
    %45 = vector.broadcast %cst_19 : f32 to vector<16x16xf32>
    %46 = arith.mulf %40, %45 : vector<16x16xf32>
    %47 = arith.subf %44, %46 : vector<16x16xf32>
    %cst_20 = arith.constant 1.98669326 : f32
    %48 = vector.broadcast %cst_20 : f32 to vector<16x16xf32>
    %49 = arith.subf %34, %48 : vector<16x16xf32>
    %50 = arith.select %42, %47, %49 : vector<16x16xi1>, vector<16x16xf32>
    %51 = math.exp %34 : vector<16x16xf32>
    %52 = arith.mulf %51, %23 : vector<16x16xf32>
    %cst_21 = arith.constant dense<0.000000e+00> : vector<16xf32>
    %53 = vector.multi_reduction <add>, %52, %cst_21 [1] : vector<16x16xf32> to vector<16xf32>
    %54 = vector.shape_cast %53 : vector<16xf32> to vector<16x1xf32>
    %55 = vector.broadcast %54 : vector<16x1xf32> to vector<16x16xf32>
    %56 = arith.subf %55, %52 : vector<16x16xf32>
    %57 = math.exp %50 : vector<16x16xf32>
    %58 = arith.addf %57, %56 : vector<16x16xf32>
    %59 = math.log %58 : vector<16x16xf32>
    %60 = arith.subf %50, %59 : vector<16x16xf32>
    %61 = tpu.reciprocal %58 {approx = true} : vector<16x16xf32> -> vector<16x16xf32>
    %62 = arith.mulf %57, %61 : vector<16x16xf32>
    %63 = arith.mulf %62, %23 : vector<16x16xf32>
    %cst_22 = arith.constant dense<0.000000e+00> : vector<16xf32>
    %64 = vector.multi_reduction <add>, %63, %cst_22 [1] : vector<16x16xf32> to vector<16xf32>
    %65 = vector.shape_cast %64 : vector<16xf32> to vector<16x1xf32>
    %66 = tpu.reciprocal %65 {approx = true} : vector<16x1xf32> -> vector<16x1xf32>
    %67 = vector.broadcast %66 : vector<16x1xf32> to vector<16x16xf32>
    %68 = arith.mulf %63, %67 : vector<16x16xf32>
    %69 = math.log %65 : vector<16x1xf32>
    %70 = vector.broadcast %69 : vector<16x1xf32> to vector<16x16xf32>
    %71 = arith.subf %60, %70 : vector<16x16xf32>
    %72 = arith.subf %71, %18 : vector<16x16xf32>
    %73 = arith.mulf %68, %72 : vector<16x16xf32>
    %cst_23 = arith.constant 5.000000e+01 : f32
    %74 = vector.broadcast %cst_23 : f32 to vector<16x16xf32>
    %75 = arith.mulf %32, %74 : vector<16x16xf32>
    %76 = arith.mulf %32, %32 : vector<16x16xf32>
    %cst_24 = arith.constant 1.000000e+00 : f32
    %77 = vector.broadcast %cst_24 : f32 to vector<16x16xf32>
    %78 = arith.subf %77, %76 : vector<16x16xf32>
    %cst_25 = arith.constant 0.000000e+00 : f32
    %79 = vector.broadcast %cst_25 : f32 to vector<16x16xf32>
    %80 = arith.maximumf %78, %79 : vector<16x16xf32>
    %81 = math.sqrt %80 : vector<16x16xf32>
    %cst_26 = arith.constant -0.980066597 : f32
    %82 = vector.broadcast %cst_26 : f32 to vector<16x16xf32>
    %83 = arith.cmpf ogt, %32, %82 : vector<16x16xf32>
    %cst_27 = arith.constant 0.980066597 : f32
    %84 = vector.broadcast %cst_27 : f32 to vector<16x16xf32>
    %85 = arith.mulf %75, %84 : vector<16x16xf32>
    %cst_28 = arith.constant 9.93346691 : f32
    %86 = vector.broadcast %cst_28 : f32 to vector<16x16xf32>
    %87 = arith.mulf %81, %86 : vector<16x16xf32>
    %88 = arith.subf %85, %87 : vector<16x16xf32>
    %cst_29 = arith.constant 1.98669326 : f32
    %89 = vector.broadcast %cst_29 : f32 to vector<16x16xf32>
    %90 = arith.subf %75, %89 : vector<16x16xf32>
    %91 = arith.select %83, %88, %90 : vector<16x16xi1>, vector<16x16xf32>
    %92 = math.exp %75 : vector<16x16xf32>
    %93 = arith.mulf %92, %23 : vector<16x16xf32>
    %cst_30 = arith.constant dense<0.000000e+00> : vector<16xf32>
    %94 = vector.multi_reduction <add>, %93, %cst_30 [1] : vector<16x16xf32> to vector<16xf32>
    %95 = vector.shape_cast %94 : vector<16xf32> to vector<16x1xf32>
    %96 = vector.broadcast %95 : vector<16x1xf32> to vector<16x16xf32>
    %97 = arith.subf %96, %93 : vector<16x16xf32>
    %98 = math.exp %91 : vector<16x16xf32>
    %99 = arith.addf %98, %97 : vector<16x16xf32>
    %100 = math.log %99 : vector<16x16xf32>
    %101 = arith.subf %91, %100 : vector<16x16xf32>
    %102 = tpu.reciprocal %99 {approx = true} : vector<16x16xf32> -> vector<16x16xf32>
    %103 = arith.mulf %98, %102 : vector<16x16xf32>
    %104 = arith.mulf %103, %23 : vector<16x16xf32>
    %cst_31 = arith.constant dense<0.000000e+00> : vector<16xf32>
    %105 = vector.multi_reduction <add>, %104, %cst_31 [1] : vector<16x16xf32> to vector<16xf32>
    %106 = vector.shape_cast %105 : vector<16xf32> to vector<16x1xf32>
    %107 = tpu.reciprocal %106 {approx = true} : vector<16x1xf32> -> vector<16x1xf32>
    %108 = vector.broadcast %107 : vector<16x1xf32> to vector<16x16xf32>
    %109 = arith.mulf %104, %108 : vector<16x16xf32>
    %110 = math.log %106 : vector<16x1xf32>
    %111 = vector.broadcast %110 : vector<16x1xf32> to vector<16x16xf32>
    %112 = arith.subf %101, %111 : vector<16x16xf32>
    %113 = arith.subf %112, %18 : vector<16x16xf32>
    %114 = arith.mulf %109, %113 : vector<16x16xf32>
    %115 = arith.addf %73, %114 : vector<16x16xf32>
    %116 = arith.mulf %115, %30 : vector<16x16xf32>
    %cst_32 = arith.constant dense<0.000000e+00> : vector<16xf32>
    %117 = vector.multi_reduction <add>, %116, %cst_32 [0] : vector<16x16xf32> to vector<16xf32>
    %118 = vector.shape_cast %117 : vector<16xf32> to vector<1x16xf32>
    %c0_33 = arith.constant 0 : index
    %c0_34 = arith.constant 0 : index
    %c0_35 = arith.constant 0 : index
    %119 = vector.load %arg7[%c0_33, %c0_34, %c0_35] : memref<1x1x16xf32, #tpu.memory_space<vmem>>, vector<1x1x16xf32>
    %120 = vector.shape_cast %119 : vector<1x1x16xf32> to vector<1x16xf32>
    %121 = vector.shape_cast %118 : vector<1x16xf32> to vector<1x1x16xf32>
    tpu.vector_store %arg7[%c0_33, %c0_34, %c0_35], %121 {strides = array<i32>} : memref<1x1x16xf32, #tpu.memory_space<vmem>>, vector<1x1x16xf32>,
    return
  }
  func.func @transform_0(%arg0: i32, %arg1: memref<1xi32, #tpu.memory_space<smem>>) -> (i32, i32) {
    %c0_i32 = arith.constant 0 : i32
    %c0_i32_0 = arith.constant 0 : i32
    %c0_i32_1 = arith.constant 0 : i32
    return %c0_i32, %c0_i32_0 : i32, i32
  }
  func.func @transform_1(%arg0: i32, %arg1: memref<1xi32, #tpu.memory_space<smem>>) -> (i32, i32) {
    %c0_i32 = arith.constant 0 : i32
    %c0_i32_0 = arith.constant 0 : i32
    %c0_i32_1 = arith.constant 0 : i32
    return %c0_i32, %c0_i32_0 : i32, i32
  }
  func.func @transform_2(%arg0: i32, %arg1: memref<1xi32, #tpu.memory_space<smem>>) -> (i32, i32) {
    %c0_i32 = arith.constant 0 : i32
    %c0_i32_0 = arith.constant 0 : i32
    return %arg0, %c0_i32 : i32, i32
  }
  func.func @transform_3(%arg0: i32, %arg1: memref<1xi32, #tpu.memory_space<smem>>) -> (i32, i32) {
    %c0_i32 = arith.constant 0 : i32
    %c0_i32_0 = arith.constant 0 : i32
    %c0_i32_1 = arith.constant 0 : i32
    return %c0_i32, %c0_i32_0 : i32, i32
  }
  func.func @transform_4(%arg0: i32, %arg1: memref<1xi32, #tpu.memory_space<smem>>) -> (i32, i32) {
    %c0_i32 = arith.constant 0 : i32
    %c0_i32_0 = arith.constant 0 : i32
    %c0_i32_1 = arith.constant 0 : i32
    return %c0_i32, %c0_i32_0 : i32, i32
  }
  func.func @transform_5(%arg0: i32, %arg1: memref<1xi32, #tpu.memory_space<smem>>) -> (i32, i32, i32) {
    %c0_i32 = arith.constant 0 : i32
    %c0_i32_0 = arith.constant 0 : i32
    %c0_i32_1 = arith.constant 0 : i32
    return %arg0, %c0_i32, %c0_i32_0 : i32, i32, i32
  }
}

module attributes {stable_mosaic.version = 11 : i64} {
  func.func @cfa_kernel(%arg0: i32, %arg1: memref<1xi32, #tpu.memory_space<smem>>, %arg2: memref<16x256xbf16, #tpu.memory_space<vmem>>, %arg3: memref<16x256xbf16, #tpu.memory_space<vmem>>, %arg4: memref<16x1xi32, #tpu.memory_space<vmem>>, %arg5: memref<1x16xi32, #tpu.memory_space<vmem>>, %arg6: memref<1x16xf32, #tpu.memory_space<vmem>>, %arg7: memref<1x1x16xf32, #tpu.memory_space<vmem>>) attributes {dimension_semantics = [#tpu.dimension_semantics<parallel>], iteration_bounds = array<i64: 1>, scalar_prefetch = 1 : i64, scratch_operands = 0 : i64, tpu.core_type = #tpu.core_type<tc>, window_params = [{pipeline_mode = #tpu.pipeline_mode<synchronous>, transform_indices = @transform_0, window_bounds = array<i64: 16, 256>}, {pipeline_mode = #tpu.pipeline_mode<synchronous>, transform_indices = @transform_1, window_bounds = array<i64: 16, 256>}, {transform_indices = @transform_2, window_bounds = array<i64: 16, 1>}, {pipeline_mode = #tpu.pipeline_mode<synchronous>, transform_indices = @transform_3, window_bounds = array<i64: 1, 16>}, {pipeline_mode = #tpu.pipeline_mode<synchronous>, transform_indices = @transform_4, window_bounds = array<i64: 1, 16>}, {transform_indices = @transform_5, window_bounds = array<i64: 1, 1, 16>}]} {
    %c0 = arith.constant 0 : index
    %0 = memref.load %arg1[%c0] : memref<1xi32, #tpu.memory_space<smem>>
    %c16_i32 = arith.constant 16 : i32
    %1 = arith.muli %arg0, %c16_i32 : i32
    %2 = tpu.assume_multiple %1, 16 : i32
    %c0_0 = arith.constant 0 : index
    %c0_1 = arith.constant 0 : index
    %3 = vector.load %arg2[%c0_0, %c0_1] : memref<16x256xbf16, #tpu.memory_space<vmem>>, vector<16x256xbf16>
    %c0_2 = arith.constant 0 : index
    %c0_3 = arith.constant 0 : index
    %4 = vector.load %arg3[%c0_2, %c0_3] : memref<16x256xbf16, #tpu.memory_space<vmem>>, vector<16x256xbf16>
    %5 = arith.index_cast %2 : i32 to index
    %c0_4 = arith.constant 0 : index
    %6 = vector.load %arg2[%5, %c0_4] : memref<16x256xbf16, #tpu.memory_space<vmem>>, vector<16x256xbf16>
    %7 = arith.index_cast %2 : i32 to index
    %c0_5 = arith.constant 0 : index
    %8 = vector.load %arg3[%7, %c0_5] : memref<16x256xbf16, #tpu.memory_space<vmem>>, vector<16x256xbf16>
    %c0_6 = arith.constant 0 : index
    %c0_7 = arith.constant 0 : index
    %9 = vector.load %arg4[%c0_6, %c0_7] : memref<16x1xi32, #tpu.memory_space<vmem>>, vector<16x1xi32>
    %c0_8 = arith.constant 0 : index
    %c0_9 = arith.constant 0 : index
    %10 = vector.load %arg5[%c0_8, %c0_9] : memref<1x16xi32, #tpu.memory_space<vmem>>, vector<1x16xi32>
    %11 = vector.broadcast %9 : vector<16x1xi32> to vector<16x16xi32>
    %12 = vector.broadcast %10 : vector<1x16xi32> to vector<16x16xi32>
    %13 = arith.cmpi eq, %11, %12 : vector<16x16xi32>
    %c0_10 = arith.constant 0 : index
    %c0_11 = arith.constant 0 : index
    %14 = vector.load %arg6[%c0_10, %c0_11] : memref<1x16xf32, #tpu.memory_space<vmem>>, vector<1x16xf32>
    %15 = vector.shape_cast %14 : vector<1x16xf32> to vector<1x16xf32>
    %16 = vector.broadcast %15 : vector<1x16xf32> to vector<16x16xf32>
    %cst = arith.constant -18.420681 : f32
    %17 = vector.broadcast %cst : f32 to vector<16x16xf32>
    %18 = arith.select %13, %16, %17 : vector<16x16xi1>, vector<16x16xf32>
    %19 = tpu.iota {dimensions = array<i32: 1>} : vector<16x16xi32>
    %20 = vector.broadcast %0 : i32 to vector<16x16xi32>
    %21 = arith.cmpi slt, %19, %20 : vector<16x16xi32>
    %22 = arith.extui %21 : vector<16x16xi1> to vector<16x16xi32>
    %23 = arith.sitofp %22 : vector<16x16xi32> to vector<16x16xf32>
    %24 = tpu.iota {dimensions = array<i32: 0>} : vector<16x16xi32>
    %25 = vector.broadcast %2 : i32 to vector<16x16xi32>
    %26 = arith.addi %24, %25 : vector<16x16xi32>
    %27 = vector.broadcast %0 : i32 to vector<16x16xi32>
    %28 = arith.cmpi slt, %26, %27 : vector<16x16xi32>
    %29 = arith.extui %28 : vector<16x16xi1> to vector<16x16xi32>
    %30 = arith.sitofp %29 : vector<16x16xi32> to vector<16x16xf32>
    %cst_12 = arith.constant dense<0.000000e+00> : vector<16x16xf32>
    %31 = tpu.matmul %6, %4, %cst_12 {dimension_numbers = #tpu.dot_dimension_numbers<[1], [1], [0], [0], [0, 0, 1, 0], [], []>} : vector<16x256xbf16>, vector<16x256xbf16>, vector<16x16xf32> -> vector<16x16xf32>
    %cst_13 = arith.constant dense<0.000000e+00> : vector<16x16xf32>
    %32 = tpu.matmul %8, %3, %cst_13 {dimension_numbers = #tpu.dot_dimension_numbers<[1], [1], [0], [0], [0, 0, 1, 0], [], []>} : vector<16x256xbf16>, vector<16x256xbf16>, vector<16x16xf32> -> vector<16x16xf32>
    %cst_14 = arith.constant 5.000000e+01 : f32
    %33 = vector.broadcast %cst_14 : f32 to vector<16x16xf32>
    %34 = arith.mulf %31, %33 : vector<16x16xf32>
    %35 = arith.mulf %31, %31 : vector<16x16xf32>
    %cst_15 = arith.constant 1.000000e+00 : f32
    %36 = vector.broadcast %cst_15 : f32 to vector<16x16xf32>
    %37 = arith.subf %36, %35 : vector<16x16xf32>
    %cst_16 = arith.constant 0.000000e+00 : f32
    %38 = vector.broadcast %cst_16 : f32 to vector<16x16xf32>
    %39 = arith.maximumf %37, %38 : vector<16x16xf32>
    %40 = math.sqrt %39 : vector<16x16xf32>
    %cst_17 = arith.constant -0.980066597 : f32
    %41 = vector.broadcast %cst_17 : f32 to vector<16x16xf32>
    %42 = arith.cmpf ogt, %31, %41 : vector<16x16xf32>
    %cst_18 = arith.constant 0.980066597 : f32
    %43 = vector.broadcast %cst_18 : f32 to vector<16x16xf32>
    %44 = arith.mulf %34, %43 : vector<16x16xf32>
    %cst_19 = arith.constant 9.93346691 : f32
    %45 = vector.broadcast %cst_19 : f32 to vector<16x16xf32>
    %46 = arith.mulf %40, %45 : vector<16x16xf32>
    %47 = arith.subf %44, %46 : vector<16x16xf32>
    %cst_20 = arith.constant 1.98669326 : f32
    %48 = vector.broadcast %cst_20 : f32 to vector<16x16xf32>
    %49 = arith.subf %34, %48 : vector<16x16xf32>
    %50 = arith.select %42, %47, %49 : vector<16x16xi1>, vector<16x16xf32>
    %51 = math.exp %34 : vector<16x16xf32>
    %52 = arith.mulf %51, %23 : vector<16x16xf32>
    %cst_21 = arith.constant dense<0.000000e+00> : vector<16xf32>
    %53 = vector.multi_reduction <add>, %52, %cst_21 [1] : vector<16x16xf32> to vector<16xf32>
    %54 = vector.shape_cast %53 : vector<16xf32> to vector<16x1xf32>
    %55 = vector.broadcast %54 : vector<16x1xf32> to vector<16x16xf32>
    %56 = arith.subf %55, %52 : vector<16x16xf32>
    %57 = math.exp %50 : vector<16x16xf32>
    %58 = arith.addf %57, %56 : vector<16x16xf32>
    %59 = math.log %58 : vector<16x16xf32>
    %60 = arith.subf %50, %59 : vector<16x16xf32>
    %61 = tpu.reciprocal %58 {approx = true} : vector<16x16xf32> -> vector<16x16xf32>
    %62 = arith.mulf %57, %61 : vector<16x16xf32>
    %63 = arith.mulf %62, %23 : vector<16x16xf32>
    %cst_22 = arith.constant dense<0.000000e+00> : vector<16xf32>
    %64 = vector.multi_reduction <add>, %63, %cst_22 [1] : vector<16x16xf32> to vector<16xf32>
    %65 = vector.shape_cast %64 : vector<16xf32> to vector<16x1xf32>
    %66 = tpu.reciprocal %65 {approx = true} : vector<16x1xf32> -> vector<16x1xf32>
    %67 = vector.broadcast %66 : vector<16x1xf32> to vector<16x16xf32>
    %68 = arith.mulf %63, %67 : vector<16x16xf32>
    %69 = math.log %65 : vector<16x1xf32>
    %70 = vector.broadcast %69 : vector<16x1xf32> to vector<16x16xf32>
    %71 = arith.subf %60, %70 : vector<16x16xf32>
    %72 = arith.subf %71, %18 : vector<16x16xf32>
    %73 = arith.mulf %68, %72 : vector<16x16xf32>
    %cst_23 = arith.constant 5.000000e+01 : f32
    %74 = vector.broadcast %cst_23 : f32 to vector<16x16xf32>
    %75 = arith.mulf %32, %74 : vector<16x16xf32>
    %76 = arith.mulf %32, %32 : vector<16x16xf32>
    %cst_24 = arith.constant 1.000000e+00 : f32
    %77 = vector.broadcast %cst_24 : f32 to vector<16x16xf32>
    %78 = arith.subf %77, %76 : vector<16x16xf32>
    %cst_25 = arith.constant 0.000000e+00 : f32
    %79 = vector.broadcast %cst_25 : f32 to vector<16x16xf32>
    %80 = arith.maximumf %78, %79 : vector<16x16xf32>
    %81 = math.sqrt %80 : vector<16x16xf32>
    %cst_26 = arith.constant -0.980066597 : f32
    %82 = vector.broadcast %cst_26 : f32 to vector<16x16xf32>
    %83 = arith.cmpf ogt, %32, %82 : vector<16x16xf32>
    %cst_27 = arith.constant 0.980066597 : f32
    %84 = vector.broadcast %cst_27 : f32 to vector<16x16xf32>
    %85 = arith.mulf %75, %84 : vector<16x16xf32>
    %cst_28 = arith.constant 9.93346691 : f32
    %86 = vector.broadcast %cst_28 : f32 to vector<16x16xf32>
    %87 = arith.mulf %81, %86 : vector<16x16xf32>
    %88 = arith.subf %85, %87 : vector<16x16xf32>
    %cst_29 = arith.constant 1.98669326 : f32
    %89 = vector.broadcast %cst_29 : f32 to vector<16x16xf32>
    %90 = arith.subf %75, %89 : vector<16x16xf32>
    %91 = arith.select %83, %88, %90 : vector<16x16xi1>, vector<16x16xf32>
    %92 = math.exp %75 : vector<16x16xf32>
    %93 = arith.mulf %92, %23 : vector<16x16xf32>
    %cst_30 = arith.constant dense<0.000000e+00> : vector<16xf32>
    %94 = vector.multi_reduction <add>, %93, %cst_30 [1] : vector<16x16xf32> to vector<16xf32>
    %95 = vector.shape_cast %94 : vector<16xf32> to vector<16x1xf32>
    %96 = vector.broadcast %95 : vector<16x1xf32> to vector<16x16xf32>
    %97 = arith.subf %96, %93 : vector<16x16xf32>
    %98 = math.exp %91 : vector<16x16xf32>
    %99 = arith.addf %98, %97 : vector<16x16xf32>
    %100 = math.log %99 : vector<16x16xf32>
    %101 = arith.subf %91, %100 : vector<16x16xf32>
    %102 = tpu.reciprocal %99 {approx = true} : vector<16x16xf32> -> vector<16x16xf32>
    %103 = arith.mulf %98, %102 : vector<16x16xf32>
    %104 = arith.mulf %103, %23 : vector<16x16xf32>
    %cst_31 = arith.constant dense<0.000000e+00> : vector<16xf32>
    %105 = vector.multi_reduction <add>, %104, %cst_31 [1] : vector<16x16xf32> to vector<16xf32>
    %106 = vector.shape_cast %105 : vector<16xf32> to vector<16x1xf32>
    %107 = tpu.reciprocal %106 {approx = true} : vector<16x1xf32> -> vector<16x1xf32>
    %108 = vector.broadcast %107 : vector<16x1xf32> to vector<16x16xf32>
    %109 = arith.mulf %104, %108 : vector<16x16xf32>
    %110 = math.log %106 : vector<16x1xf32>
    %111 = vector.broadcast %110 : vector<16x1xf32> to vector<16x16xf32>
    %112 = arith.subf %101, %111 : vector<16x16xf32>
    %113 = arith.subf %112, %18 : vector<16x16xf32>
    %114 = arith.mulf %109, %113 : vector<16x16xf32>
    %115 = arith.addf %73, %114 : vector<16x16xf32>
    %116 = arith.mulf %115, %30 : vector<16x16xf32>
    %cst_32 = arith.constant dense<0.000000e+00> : vector<16xf32>
    %117 = vector.multi_reduction <add>, %116, %cst_32 [0] : vector<16x16xf32> to vector<16xf32>
    %118 = vector.shape_cast %117 : vector<16xf32> to vector<1x16xf32>
    %c0_33 = arith.constant 0 : index
    %c0_34 = arith.constant 0 : index
    %c0_35 = arith.constant 0 : index
    %119 = vector.load %arg7[%c0_33, %c0_34, %c0_35] : memref<1x1x16xf32, #tpu.memory_space<vmem>>, vector<1x1x16xf32>
    %120 = vector.shape_cast %119 : vector<1x1x16xf32> to vector<1x16xf32>
    %121 = vector.shape_cast %118 : vector<1x16xf32> to vector<1x1x16xf32>
    tpu.vector_store %arg7[%c0_33, %c0_34, %c0_35], %121 {strides = array<i32>} : memref<1x1x16xf32, #tpu.memory_space<vmem>>, vector<1x1x16xf32>,
    return
  }
  func.func @transform_0(%arg0: i32, %arg1: memref<1xi32, #tpu.memory_space<smem>>) -> (i32, i32) {
    %c0_i32 = arith.constant 0 : i32
    %c0_i32_0 = arith.constant 0 : i32
    %c0_i32_1 = arith.constant 0 : i32
    return %c0_i32, %c0_i32_0 : i32, i32
  }
  func.func @transform_1(%arg0: i32, %arg1: memref<1xi32, #tpu.memory_space<smem>>) -> (i32, i32) {
    %c0_i32 = arith.constant 0 : i32
    %c0_i32_0 = arith.constant 0 : i32
    %c0_i32_1 = arith.constant 0 : i32
    return %c0_i32, %c0_i32_0 : i32, i32
  }
  func.func @transform_2(%arg0: i32, %arg1: memref<1xi32, #tpu.memory_space<smem>>) -> (i32, i32) {
    %c0_i32 = arith.constant 0 : i32
    %c0_i32_0 = arith.constant 0 : i32
    return %arg0, %c0_i32 : i32, i32
  }
  func.func @transform_3(%arg0: i32, %arg1: memref<1xi32, #tpu.memory_space<smem>>) -> (i32, i32) {
    %c0_i32 = arith.constant 0 : i32
    %c0_i32_0 = arith.constant 0 : i32
    %c0_i32_1 = arith.constant 0 : i32
    return %c0_i32, %c0_i32_0 : i32, i32
  }
  func.func @transform_4(%arg0: i32, %arg1: memref<1xi32, #tpu.memory_space<smem>>) -> (i32, i32) {
    %c0_i32 = arith.constant 0 : i32
    %c0_i32_0 = arith.constant 0 : i32
    %c0_i32_1 = arith.constant 0 : i32
    return %c0_i32, %c0_i32_0 : i32, i32
  }
  func.func @transform_5(%arg0: i32, %arg1: memref<1xi32, #tpu.memory_space<smem>>) -> (i32, i32, i32) {
    %c0_i32 = arith.constant 0 : i32
    %c0_i32_0 = arith.constant 0 : i32
    %c0_i32_1 = arith.constant 0 : i32
    return %arg0, %c0_i32, %c0_i32_0 : i32, i32, i32
  }
}

</mosaic_0001>

<llo_original>
// kernel: tpu_custom_call.1
$region0: #{tpu_custom_call.1}
  #allocation0 [shape = 'u32[]', space=smem, size = 0x4, offset = 0x4, fixed_abs, tag = 'smem constant byte address 0x4 - core index']
  #allocation1 [shape = 'u32[144,128]{1,0:T(1,128)}', space=vmem, size = 0x12000, scoped, tag = 'internal scratch']
  #allocation2 [shape = 's32[1]{0}', space=sflag, size = 0x4, scoped, tag = 'scoped memory for tpu_custom_call.1']
  #allocation3 [shape = 's32[1]{0:T(128)S(6)}', space=smem, size = 0x200, scoped, tag = 'prefetched SMEM operand 0']
  %s0 = inlined_call_operand.<no memory space> [shape: s32[1], index: 0, kind: input, shape index: {}]
  %s1 = inlined_call_operand.vmem [shape: bf16[16,256], index: 1, kind: input, shape index: {}]
  %s2 = inlined_call_operand.hbm [shape: bf16[16,256], index: 2, kind: input, shape index: {}]
  %s3 = inlined_call_operand.vmem [shape: s32[16,1], index: 3, kind: input, shape index: {}]
  %s4 = inlined_call_operand.vmem [shape: s32[1,16], index: 4, kind: input, shape index: {}]
  %s5 = inlined_call_operand.vmem [shape: f32[1,16], index: 5, kind: input, shape index: {}]
  %s6 = inlined_call_operand.hbm [shape: f32[1,1,16], index: 6, kind: output, shape index: {}]
  %s7 = sld [smem:[#allocation0]]
  $region34: #{tpu_custom_call.1} parent=0
    _
  %s9 = ssub.s32 1, %s7
  %s10 = scalar_select 0, %s9, %s7
  %11 = sst [smem:[#allocation3]] %s0
  $region1: #{tpu_custom_call.1} parent=0
    #allocation4 [shape = 'u8[8192]{0}', space=vmem, size = 0x2000, scoped, tag = 'input window, operand 2, single buffered']
    #allocation5 [shape = 's32[1]{0}', space=sflag, size = 0x4, scoped, tag = 'scoped memory for tpu_custom_call.1']
    #allocation6 [shape = 's32[1]{0}', space=sflag, size = 0x4, scoped, tag = 'scoped memory for tpu_custom_call.1']
    #allocation7 [shape = 'u8[512]{0}', space=vmem, size = 0x400, scoped, tag = 'output window, operand 0, single buffered']
    %12 = vsyncpa [#allocation5], 0
    %13 = vsyncpa [#allocation6], 0
    // Predicated region
    $region2: #{tpu_custom_call.1} parent=1 // pred_check
      _
    $region3: #{tpu_custom_call.1} parent=1 // pred_check_branch
      %15 = sbr.rel (0) target = $region5
    $region4: #{tpu_custom_call.1} parent=1 // pred_region
      _
    $region5: #{tpu_custom_call.1} parent=1 // pred_fallthru
      _
    // Predicated region
    $region6: #{tpu_custom_call.1} parent=1 // pred_check
      _
    $region7: #{tpu_custom_call.1} parent=1 // pred_check_branch
      %17 = sbr.rel (0) target = $region9
    $region8: #{tpu_custom_call.1} parent=1 // pred_region
      %s19 = ssub.s32 256, 256
      %20 = vsyncadd [#allocation5], %s19
      %s21 = sshll.u32 [#allocation4], 4
      %s22 = int_to_ptr.vmem [resolvable:$true] %s21
      %27 = dma.hbm_to_vmem [thread:$0]  %s2, 256, %s22, [#allocation5], 128, 128, 8
    $region9: #{tpu_custom_call.1} parent=1 // pred_fallthru
      _
    // Predicated region
    $region10: #{tpu_custom_call.1} parent=1 // pred_check
      _
    $region11: #{tpu_custom_call.1} parent=1 // pred_check_branch
      %29 = sbr.rel (0) target = $region13
    $region12: #{tpu_custom_call.1} parent=1 // pred_region
      _
    $region13: #{tpu_custom_call.1} parent=1 // pred_fallthru
      _
    // Predicated region
    $region14: #{tpu_custom_call.1} parent=1 // pred_check
      _
    $region15: #{tpu_custom_call.1} parent=1 // pred_check_branch
      %31 = sbr.rel (0) target = $region17
    $region16: #{tpu_custom_call.1} parent=1 // pred_region
      _
    $region17: #{tpu_custom_call.1} parent=1 // pred_fallthru
      _
    // Predicated region
    $region18: #{tpu_custom_call.1} parent=1 // pred_check
      _
    $region19: #{tpu_custom_call.1} parent=1 // pred_check_branch
      %33 = sbr.rel (0) target = $region21
    $region20: #{tpu_custom_call.1} parent=1 // pred_region
      _
    $region21: #{tpu_custom_call.1} parent=1 // pred_fallthru
      _
    // Predicated region
    $region22: #{tpu_custom_call.1} parent=1 // pred_check
      _
    $region23: #{tpu_custom_call.1} parent=1 // pred_check_branch
      %35 = sbr.rel (0) target = $region25
    $region24: #{tpu_custom_call.1} parent=1 // pred_region
      %36 = dma.done [#allocation5], 256
    $region25: #{tpu_custom_call.1} parent=1 // pred_fallthru
      _
    %s38 = sld [smem:[#allocation3]]
    %s39 = smul.u32 0, 16
    %v40 = vld [vmem:[%s1] sm:$0xff]
    %v41 = vld [vmem:[%s1 + $0x8] sm:$0xff]
    %v42 = vld [vmem:[#allocation4] sm:$0xff]
    %v43 = vld [vmem:[#allocation4 + $0x8] sm:$0xff]
    %s44 = sshra.s32 %s39, 3
    %s45 = sand.u32 %s39, 7
    %s46 = smul.u32 %s44, 2
    %s47 = smul.addr %s46, 4
    %s48 = scalar_lea.vmem %s1, %s47
    %v49 = vld [vmem:[%s48] sm:$0xff]
    %v50 = vld [vmem:[%s48 + $0x8] sm:$0xff]
    %s51 = smul.addr %s46, 4
    %s52 = scalar_lea.vmem [#allocation4], %s51
    %v53 = vld [vmem:[%s52] sm:$0xff]
    %v54 = vld [vmem:[%s52 + $0x8] sm:$0xff]
    %v55 = vld [vmem:[%s3] sm:$0xff]
    %v56 = vld [vmem:[%s3 + $0x8] sm:$0xff]
    %v57 = vld [vmem:[%s4] sm:$0x1]
    %58 = vset.pattern.permute.xlu0 0
    %59 = vperm.xlu0 %58, %v55
    %v60 = vpop.permute.xlu0 %59
    %61 = vset.pattern.permute.xlu0 0
    %62 = vperm.xlu0 %61, %v56
    %v63 = vpop.permute.xlu0 %62
    %v64 = vlaneseq
    %v65 = vshrl.u32 %v64, 7
    %v66 = vsub.s32 0, %v65
    %v67 = vrot.slane %v57, %v66
    %vm68 = vcmp.eq.s32.totalorder %v60, %v67
    %vm69 = vcmp.eq.s32.totalorder %v63, %v67
    %v70 = vld [vmem:[%s5] sm:$0x1]
    %v72 = vlaneseq
    %v73 = vshrl.u32 %v72, 7
    %v74 = vsub.s32 0, %v73
    %v75 = vrot.slane %v70, %v74
    %v77 = vsel %vm68, %v75, -18.420681
    %v78 = vsel %vm69, %v75, -18.420681
    %v79 = vlaneseq
    %v80 = vand.u32 %v79, 127
    %v81 = vstv %s38
    %vm82 = vcmp.lt.s32.totalorder %v80, %v81
    %v83 = vsel %vm82, 1, 0
    %v84 = vcvt.s32.f32 %v83
    %v85 = vlaneseq
    %v86 = vshrl.u32 %v85, 7
    %v87 = vadd.s32 %v86, 8
    %v88 = vstv %s39
    %v89 = vadd.s32 %v86, %v88
    %v90 = vadd.s32 %v87, %v88
    %vm91 = vcmp.lt.s32.totalorder %v89, %v81
    %vm92 = vcmp.lt.s32.totalorder %v90, %v81
    %v93 = vsel %vm91, 1, 0
    %v94 = vsel %vm92, 1, 0
    %v95 = vcvt.s32.f32 %v93
    %v96 = vcvt.s32.f32 %v94
    %v99 = vunpack.c.l.b16 %v49
    %v100 = vunpack.c.h.b16 %v49
    %v101 = vunpack.c.l.b16 %v50
    %v102 = vunpack.c.h.b16 %v50
    %v103 = vpack.c.b16 %v101, %v99
    %v104 = vpack.c.b16 %v102, %v100
    %v109 = vunpack.c.l.b16 %v42
    %v110 = vunpack.c.h.b16 %v42
    %v111 = vunpack.c.l.b16 %v43
    %v112 = vunpack.c.h.b16 %v43
    %v113 = vpack.c.b16 %v111, %v109
    %v114 = vpack.c.b16 %v112, %v110
    %117 = vmatprep.subr.bf16.mxu0 %v114
    %118 = vmatpush1.bf16.xpose.msra.mxu0 %v113
    %119 = vmatprep.subr.bf16.mxu0 0
    %120 = vmatpush1.bf16.xpose.msra.mxu0 0
    %121 = vmatprep.subr.bf16.mxu0 0
    %122 = vmatpush1.bf16.xpose.msra.mxu0 0
    %123 = vmatprep.subr.bf16.mxu0 0
    %124 = vmatpush1.bf16.xpose.msra.mxu0 0
    %125 = vmatprep.subr.bf16.mxu0 0
    %126 = vmatpush1.bf16.xpose.msra.mxu0 0
    %127 = vmatprep.subr.bf16.mxu0 0
    %128 = vmatpush1.bf16.xpose.msra.mxu0 0
    %129 = vmatprep.subr.bf16.mxu0 0
    %130 = vmatpush1.bf16.xpose.msra.mxu0 0
    %131 = vmatprep.subr.bf16.mxu0 0
    %132 = vmatpush1.bf16.xpose.msra.mxu0 0
    %133 = vmatprep.subr.bf16.mxu0 0
    %134 = vmatpush1.bf16.xpose.msra.mxu0 0
    %135 = vmatprep.subr.bf16.mxu0 0
    %136 = vmatpush1.bf16.xpose.msra.mxu0 0
    %137 = vmatprep.subr.bf16.mxu0 0
    %138 = vmatpush1.bf16.xpose.msra.mxu0 0
    %139 = vmatprep.subr.bf16.mxu0 0
    %140 = vmatpush1.bf16.xpose.msra.mxu0 0
    %141 = vmatprep.subr.bf16.mxu0 0
    %142 = vmatpush1.bf16.xpose.msra.mxu0 0
    %143 = vmatprep.subr.bf16.mxu0 0
    %144 = vmatpush1.bf16.xpose.msra.mxu0 0
    %145 = vmatprep.subr.bf16.mxu0 0
    %146 = vmatpush1.bf16.xpose.msra.mxu0 0
    %147 = vmatprep.subr.bf16.mxu0 0
    %148 = vmatpush1.bf16.xpose.msra.mxu0 0
    %149 = vmatprep.mubr.bf16.mxu0 %v104
    %150 = vmatmul.mubr.bf16.gmra.mrb[0].mxu0 %v103
    %v151 = vpop.f32.mrb[0].mxu0
    %v152 = vadd.f32 0.0, %v151
    %v153 = vpop.f32.mrb[0].mxu0
    %v154 = vpop.f32.mrb[0].mxu0
    %v155 = vadd.f32 0.0, %v154
    %v156 = vpop.f32.mrb[0].mxu0
    %157 = vdwg.mxu0
    %v160 = vunpack.c.l.b16 %v53
    %v161 = vunpack.c.h.b16 %v53
    %v162 = vunpack.c.l.b16 %v54
    %v163 = vunpack.c.h.b16 %v54
    %v164 = vpack.c.b16 %v162, %v160
    %v165 = vpack.c.b16 %v163, %v161
    %v170 = vunpack.c.l.b16 %v40
    %v171 = vunpack.c.h.b16 %v40
    %v172 = vunpack.c.l.b16 %v41
    %v173 = vunpack.c.h.b16 %v41
    %v174 = vpack.c.b16 %v172, %v170
    %v175 = vpack.c.b16 %v173, %v171
    %178 = vmatprep.subr.bf16.mxu0 %v175
    %179 = vmatpush1.bf16.xpose.msra.mxu0 %v174
    %180 = vmatprep.subr.bf16.mxu0 0
    %181 = vmatpush1.bf16.xpose.msra.mxu0 0
    %182 = vmatprep.subr.bf16.mxu0 0
    %183 = vmatpush1.bf16.xpose.msra.mxu0 0
    %184 = vmatprep.subr.bf16.mxu0 0
    %185 = vmatpush1.bf16.xpose.msra.mxu0 0
    %186 = vmatprep.subr.bf16.mxu0 0
    %187 = vmatpush1.bf16.xpose.msra.mxu0 0
    %188 = vmatprep.subr.bf16.mxu0 0
    %189 = vmatpush1.bf16.xpose.msra.mxu0 0
    %190 = vmatprep.subr.bf16.mxu0 0
    %191 = vmatpush1.bf16.xpose.msra.mxu0 0
    %192 = vmatprep.subr.bf16.mxu0 0
    %193 = vmatpush1.bf16.xpose.msra.mxu0 0
    %194 = vmatprep.subr.bf16.mxu0 0
    %195 = vmatpush1.bf16.xpose.msra.mxu0 0
    %196 = vmatprep.subr.bf16.mxu0 0
    %197 = vmatpush1.bf16.xpose.msra.mxu0 0
    %198 = vmatprep.subr.bf16.mxu0 0
    %199 = vmatpush1.bf16.xpose.msra.mxu0 0
    %200 = vmatprep.subr.bf16.mxu0 0
    %201 = vmatpush1.bf16.xpose.msra.mxu0 0
    %202 = vmatprep.subr.bf16.mxu0 0
    %203 = vmatpush1.bf16.xpose.msra.mxu0 0
    %204 = vmatprep.subr.bf16.mxu0 0
    %205 = vmatpush1.bf16.xpose.msra.mxu0 0
    %206 = vmatprep.subr.bf16.mxu0 0
    %207 = vmatpush1.bf16.xpose.msra.mxu0 0
    %208 = vmatprep.subr.bf16.mxu0 0
    %209 = vmatpush1.bf16.xpose.msra.mxu0 0
    %210 = vmatprep.mubr.bf16.mxu0 %v165
    %211 = vmatmul.mubr.bf16.gmra.mrb[0].mxu0 %v164
    %v212 = vpop.f32.mrb[0].mxu0
    %v213 = vadd.f32 0.0, %v212
    %v214 = vpop.f32.mrb[0].mxu0
    %v215 = vpop.f32.mrb[0].mxu0
    %v216 = vadd.f32 0.0, %v215
    %v217 = vpop.f32.mrb[0].mxu0
    %218 = vdwg.mxu0
    %v219 = vmul.f32 %v152, 50.0
    %v220 = vmul.f32 %v155, 50.0
    %v221 = vmul.f32 %v152, %v152
    %v222 = vmul.f32 %v155, %v155
    %v223 = vsub.f32 1.0, %v221
    %v224 = vsub.f32 1.0, %v222
    %v225 = vmax.f32 %v223, 0.0
    %v226 = vmax.f32 %v224, 0.0
    %v227 = vrsqrt.pop %v225
    %v228 = vmul.f32 %v225, %v227
    %vm229 = vcmp.eq.f32.partialorder %v225, inf
    %v230 = vsel %vm229, %v225, %v228
    %vm231 = vcmp.eq.f32.partialorder %v225, 0.0
    %v232 = vand.u32 %v225, 2147483648
    %v233 = vsel %vm231, %v232, %v230
    %v234 = vrsqrt.pop %v226
    %v235 = vmul.f32 %v226, %v234
    %vm236 = vcmp.eq.f32.partialorder %v226, inf
    %v237 = vsel %vm236, %v226, %v235
    %vm238 = vcmp.eq.f32.partialorder %v226, 0.0
    %v239 = vand.u32 %v226, 2147483648
    %v240 = vsel %vm238, %v239, %v237
    %vm241 = vcmp.gt.f32.partialorder %v152, -0.9800666
    %vm242 = vcmp.gt.f32.partialorder %v155, -0.9800666
    %v243 = vmul.f32 %v219, 0.9800666
    %v244 = vmul.f32 %v220, 0.9800666
    %v245 = vmul.f32 %v233, 9.933467
    %v246 = vmul.f32 %v240, 9.933467
    %v247 = vsub.f32 %v243, %v245
    %v248 = vsub.f32 %v244, %v246
    %v249 = vsub.f32 %v219, 1.9866933
    %v250 = vsub.f32 %v220, 1.9866933
    %v251 = vsel %vm241, %v247, %v249
    %v252 = vsel %vm242, %v248, %v250
    %v253 = vmul.f32 %v219, 1.442695
    %v254 = vpow.pop %v253
    %v255 = vmul.f32 %v220, 1.442695
    %v256 = vpow.pop %v255
    %v257 = vmul.f32 %v254, %v84
    %v258 = vmul.f32 %v256, %v84
    %vm259 = vcmask 130048
    %v260 = vsel %vm259, %v257, 0.0
    %261 = vadd.xlane.f32.xlu0 %v260
    %v262 = vpop.xlane.xlu0 %261
    %v263 = vsel %vm259, %v258, 0.0
    %264 = vadd.xlane.f32.xlu0 %v263
    %v265 = vpop.xlane.xlu0 %264
    %v266 = vsub.f32 %v262, %v257
    %v267 = vsub.f32 %v265, %v258
    %v268 = vmul.f32 %v251, 1.442695
    %v269 = vpow.pop %v268
    %v270 = vmul.f32 %v252, 1.442695
    %v271 = vpow.pop %v270
    %v272 = vadd.f32 %v269, %v266
    %v273 = vadd.f32 %v271, %v267
    %v274 = vlog2.pop %v272
    %v275 = vmul.f32 %v274, 0.6931472
    %v276 = vlog2.pop %v273
    %v277 = vmul.f32 %v276, 0.6931472
    %v278 = vsub.f32 %v251, %v275
    %v279 = vsub.f32 %v252, %v277
    %v280 = vrcp.pop %v272
    %v281 = vrcp.pop %v273
    %v282 = vmul.f32 %v269, %v280
    %v283 = vmul.f32 %v271, %v281
    %v284 = vmul.f32 %v282, %v84
    %v285 = vmul.f32 %v283, %v84
    %v286 = vsel %vm259, %v284, 0.0
    %287 = vadd.xlane.f32.xlu0 %v286
    %v288 = vpop.xlane.xlu0 %287
    %v289 = vsel %vm259, %v285, 0.0
    %290 = vadd.xlane.f32.xlu0 %v289
    %v291 = vpop.xlane.xlu0 %290
    %v292 = vrcp.pop %v288
    %v293 = vrcp.pop %v291
    %v294 = vmul.f32 %v284, %v292
    %v295 = vmul.f32 %v285, %v293
    %v296 = vlog2.pop %v288
    %v297 = vmul.f32 %v296, 0.6931472
    %v298 = vlog2.pop %v291
    %v299 = vmul.f32 %v298, 0.6931472
    %v300 = vsub.f32 %v278, %v297
    %v301 = vsub.f32 %v279, %v299
    %v302 = vsub.f32 %v300, %v77
    %v303 = vsub.f32 %v301, %v78
    %v304 = vmul.f32 %v294, %v302
    %v305 = vmul.f32 %v295, %v303
    %v306 = vmul.f32 %v213, 50.0
    %v307 = vmul.f32 %v216, 50.0
    %v308 = vmul.f32 %v213, %v213
    %v309 = vmul.f32 %v216, %v216
    %v310 = vsub.f32 1.0, %v308
    %v311 = vsub.f32 1.0, %v309
    %v312 = vmax.f32 %v310, 0.0
    %v313 = vmax.f32 %v311, 0.0
    %v314 = vrsqrt.pop %v312
    %v315 = vmul.f32 %v312, %v314
    %vm316 = vcmp.eq.f32.partialorder %v312, inf
    %v317 = vsel %vm316, %v312, %v315
    %vm318 = vcmp.eq.f32.partialorder %v312, 0.0
    %v319 = vand.u32 %v312, 2147483648
    %v320 = vsel %vm318, %v319, %v317
    %v321 = vrsqrt.pop %v313
    %v322 = vmul.f32 %v313, %v321
    %vm323 = vcmp.eq.f32.partialorder %v313, inf
    %v324 = vsel %vm323, %v313, %v322
    %vm325 = vcmp.eq.f32.partialorder %v313, 0.0
    %v326 = vand.u32 %v313, 2147483648
    %v327 = vsel %vm325, %v326, %v324
    %vm328 = vcmp.gt.f32.partialorder %v213, -0.9800666
    %vm329 = vcmp.gt.f32.partialorder %v216, -0.9800666
    %v330 = vmul.f32 %v306, 0.9800666
    %v331 = vmul.f32 %v307, 0.9800666
    %v332 = vmul.f32 %v320, 9.933467
    %v333 = vmul.f32 %v327, 9.933467
    %v334 = vsub.f32 %v330, %v332
    %v335 = vsub.f32 %v331, %v333
    %v336 = vsub.f32 %v306, 1.9866933
    %v337 = vsub.f32 %v307, 1.9866933
    %v338 = vsel %vm328, %v334, %v336
    %v339 = vsel %vm329, %v335, %v337
    %v340 = vmul.f32 %v306, 1.442695
    %v341 = vpow.pop %v340
    %v342 = vmul.f32 %v307, 1.442695
    %v343 = vpow.pop %v342
    %v344 = vmul.f32 %v341, %v84
    %v345 = vmul.f32 %v343, %v84
    %v346 = vsel %vm259, %v344, 0.0
    %347 = vadd.xlane.f32.xlu0 %v346
    %v348 = vpop.xlane.xlu0 %347
    %v349 = vsel %vm259, %v345, 0.0
    %350 = vadd.xlane.f32.xlu0 %v349
    %v351 = vpop.xlane.xlu0 %350
    %v352 = vsub.f32 %v348, %v344
    %v353 = vsub.f32 %v351, %v345
    %v354 = vmul.f32 %v338, 1.442695
    %v355 = vpow.pop %v354
    %v356 = vmul.f32 %v339, 1.442695
    %v357 = vpow.pop %v356
    %v358 = vadd.f32 %v355, %v352
    %v359 = vadd.f32 %v357, %v353
    %v360 = vlog2.pop %v358
    %v361 = vmul.f32 %v360, 0.6931472
    %v362 = vlog2.pop %v359
    %v363 = vmul.f32 %v362, 0.6931472
    %v364 = vsub.f32 %v338, %v361
    %v365 = vsub.f32 %v339, %v363
    %v366 = vrcp.pop %v358
    %v367 = vrcp.pop %v359
    %v368 = vmul.f32 %v355, %v366
    %v369 = vmul.f32 %v357, %v367
    %v370 = vmul.f32 %v368, %v84
    %v371 = vmul.f32 %v369, %v84
    %v372 = vsel %vm259, %v370, 0.0
    %373 = vadd.xlane.f32.xlu0 %v372
    %v374 = vpop.xlane.xlu0 %373
    %v375 = vsel %vm259, %v371, 0.0
    %376 = vadd.xlane.f32.xlu0 %v375
    %v377 = vpop.xlane.xlu0 %376
    %v378 = vrcp.pop %v374
    %v379 = vrcp.pop %v377
    %v380 = vmul.f32 %v370, %v378
    %v381 = vmul.f32 %v371, %v379
    %v382 = vlog2.pop %v374
    %v383 = vmul.f32 %v382, 0.6931472
    %v384 = vlog2.pop %v377
    %v385 = vmul.f32 %v384, 0.6931472
    %v386 = vsub.f32 %v364, %v383
    %v387 = vsub.f32 %v365, %v385
    %v388 = vsub.f32 %v386, %v77
    %v389 = vsub.f32 %v387, %v78
    %v390 = vmul.f32 %v380, %v388
    %v391 = vmul.f32 %v381, %v389
    %v392 = vadd.f32 %v304, %v390
    %v393 = vadd.f32 %v305, %v391
    %v394 = vmul.f32 %v392, %v95
    %v395 = vmul.f32 %v393, %v96
    %v396 = vsel %vm259, %v394, 0.0
    %v397 = vsel %vm259, %v395, 0.0
    %v398 = vadd.f32 %v396, %v397
    %v399 = vrot.slane %v398, 4
    %v400 = vadd.f32 %v398, %v399
    %v401 = vrot.slane %v400, 2
    %v402 = vadd.f32 %v400, %v401
    %v403 = vrot.slane %v402, 1
    %v404 = vadd.f32 %v402, %v403
    %vm405 = vcmask 122880
    %406 = vst.msk [vmem:[#allocation7] sm:$0x1] %vm405, %v404
    // Predicated region
    $region26: #{tpu_custom_call.1} parent=1 // pred_check
      _
    $region27: #{tpu_custom_call.1} parent=1 // pred_check_branch
      %408 = sbr.rel (0) target = $region29
    $region28: #{tpu_custom_call.1} parent=1 // pred_region
      %s410 = ssub.s32 16, 16
      %411 = vsyncadd [#allocation6], %s410
      %s413 = sshll.u32 [#allocation7], 4
      %s414 = int_to_ptr.vmem [resolvable:$true] %s413
      %416 = dma.vmem_to_hbm [thread:$0]  %s414, 16, %s6, [#allocation6]
    $region29: #{tpu_custom_call.1} parent=1 // pred_fallthru
      _
    // Predicated region
    $region30: #{tpu_custom_call.1} parent=1 // pred_check
      _
    $region31: #{tpu_custom_call.1} parent=1 // pred_check_branch
      %418 = sbr.rel (0) target = $region33
    $region32: #{tpu_custom_call.1} parent=1 // pred_region
      %419 = dma.done [#allocation6], 16
    $region33: #{tpu_custom_call.1} parent=1 // pred_fallthru
      _
    %420 = vsyncpa [#allocation5], 1
    %421 = vsyncpa [#allocation6], 1

// kernel: tpu_custom_call.1
$region0: #{tpu_custom_call.1}
  #allocation0 [shape = 'u32[]', space=smem, size = 0x4, offset = 0x4, fixed_abs, tag = 'smem constant byte address 0x4 - core index']
  #allocation1 [shape = 'u32[144,128]{1,0:T(1,128)}', space=vmem, size = 0x12000, scoped, tag = 'internal scratch']
  #allocation2 [shape = 's32[1]{0}', space=sflag, size = 0x4, scoped, tag = 'scoped memory for tpu_custom_call.1']
  #allocation3 [shape = 's32[1]{0:T(128)S(6)}', space=smem, size = 0x200, scoped, tag = 'prefetched SMEM operand 0']
  %s0 = inlined_call_operand.<no memory space> [shape: s32[1], index: 0, kind: input, shape index: {}]
  %s1 = inlined_call_operand.vmem [shape: bf16[16,256], index: 1, kind: input, shape index: {}]
  %s2 = inlined_call_operand.hbm [shape: bf16[16,256], index: 2, kind: input, shape index: {}]
  %s3 = inlined_call_operand.vmem [shape: s32[16,1], index: 3, kind: input, shape index: {}]
  %s4 = inlined_call_operand.vmem [shape: s32[1,16], index: 4, kind: input, shape index: {}]
  %s5 = inlined_call_operand.vmem [shape: f32[1,16], index: 5, kind: input, shape index: {}]
  %s6 = inlined_call_operand.hbm [shape: f32[1,1,16], index: 6, kind: output, shape index: {}]
  %s7 = sld [smem:[#allocation0]]
  $region34: #{tpu_custom_call.1} parent=0
    _
  %s9 = ssub.s32 1, %s7
  %s10 = scalar_select 0, %s9, %s7
  %11 = sst [smem:[#allocation3]] %s0
  $region1: #{tpu_custom_call.1} parent=0
    #allocation4 [shape = 'u8[8192]{0}', space=vmem, size = 0x2000, scoped, tag = 'input window, operand 2, single buffered']
    #allocation5 [shape = 's32[1]{0}', space=sflag, size = 0x4, scoped, tag = 'scoped memory for tpu_custom_call.1']
    #allocation6 [shape = 's32[1]{0}', space=sflag, size = 0x4, scoped, tag = 'scoped memory for tpu_custom_call.1']
    #allocation7 [shape = 'u8[512]{0}', space=vmem, size = 0x400, scoped, tag = 'output window, operand 0, single buffered']
    %12 = vsyncpa [#allocation5], 0
    %13 = vsyncpa [#allocation6], 0
    // Predicated region
    $region2: #{tpu_custom_call.1} parent=1 // pred_check
      _
    $region3: #{tpu_custom_call.1} parent=1 // pred_check_branch
      %15 = sbr.rel (0) target = $region5
    $region4: #{tpu_custom_call.1} parent=1 // pred_region
      _
    $region5: #{tpu_custom_call.1} parent=1 // pred_fallthru
      _
    // Predicated region
    $region6: #{tpu_custom_call.1} parent=1 // pred_check
      _
    $region7: #{tpu_custom_call.1} parent=1 // pred_check_branch
      %17 = sbr.rel (0) target = $region9
    $region8: #{tpu_custom_call.1} parent=1 // pred_region
      %s19 = ssub.s32 256, 256
      %20 = vsyncadd [#allocation5], %s19
      %s21 = sshll.u32 [#allocation4], 4
      %s22 = int_to_ptr.vmem [resolvable:$true] %s21
      %27 = dma.hbm_to_vmem [thread:$0]  %s2, 256, %s22, [#allocation5], 128, 128, 8
    $region9: #{tpu_custom_call.1} parent=1 // pred_fallthru
      _
    // Predicated region
    $region10: #{tpu_custom_call.1} parent=1 // pred_check
      _
    $region11: #{tpu_custom_call.1} parent=1 // pred_check_branch
      %29 = sbr.rel (0) target = $region13
    $region12: #{tpu_custom_call.1} parent=1 // pred_region
      _
    $region13: #{tpu_custom_call.1} parent=1 // pred_fallthru
      _
    // Predicated region
    $region14: #{tpu_custom_call.1} parent=1 // pred_check
      _
    $region15: #{tpu_custom_call.1} parent=1 // pred_check_branch
      %31 = sbr.rel (0) target = $region17
    $region16: #{tpu_custom_call.1} parent=1 // pred_region
      _
    $region17: #{tpu_custom_call.1} parent=1 // pred_fallthru
      _
    // Predicated region
    $region18: #{tpu_custom_call.1} parent=1 // pred_check
      _
    $region19: #{tpu_custom_call.1} parent=1 // pred_check_branch
      %33 = sbr.rel (0) target = $region21
    $region20: #{tpu_custom_call.1} parent=1 // pred_region
      _
    $region21: #{tpu_custom_call.1} parent=1 // pred_fallthru
      _
    // Predicated region
    $region22: #{tpu_custom_call.1} parent=1 // pred_check
      _
    $region23: #{tpu_custom_call.1} parent=1 // pred_check_branch
      %35 = sbr.rel (0) target = $region25
    $region24: #{tpu_custom_call.1} parent=1 // pred_region
      %36 = dma.done [#allocation5], 256
    $region25: #{tpu_custom_call.1} parent=1 // pred_fallthru
      _
    %s38 = sld [smem:[#allocation3]]
    %s39 = smul.u32 0, 16
    %v40 = vld [vmem:[%s1] sm:$0xff]
    %v41 = vld [vmem:[%s1 + $0x8] sm:$0xff]
    %v42 = vld [vmem:[#allocation4] sm:$0xff]
    %v43 = vld [vmem:[#allocation4 + $0x8] sm:$0xff]
    %s44 = sshra.s32 %s39, 3
    %s45 = sand.u32 %s39, 7
    %s46 = smul.u32 %s44, 2
    %s47 = smul.addr %s46, 4
    %s48 = scalar_lea.vmem %s1, %s47
    %v49 = vld [vmem:[%s48] sm:$0xff]
    %v50 = vld [vmem:[%s48 + $0x8] sm:$0xff]
    %s51 = smul.addr %s46, 4
    %s52 = scalar_lea.vmem [#allocation4], %s51
    %v53 = vld [vmem:[%s52] sm:$0xff]
    %v54 = vld [vmem:[%s52 + $0x8] sm:$0xff]
    %v55 = vld [vmem:[%s3] sm:$0xff]
    %v56 = vld [vmem:[%s3 + $0x8] sm:$0xff]
    %v57 = vld [vmem:[%s4] sm:$0x1]
    %58 = vset.pattern.permute.xlu0 0
    %59 = vperm.xlu0 %58, %v55
    %v60 = vpop.permute.xlu0 %59
    %61 = vset.pattern.permute.xlu0 0
    %62 = vperm.xlu0 %61, %v56
    %v63 = vpop.permute.xlu0 %62
    %v64 = vlaneseq
    %v65 = vshrl.u32 %v64, 7
    %v66 = vsub.s32 0, %v65
    %v67 = vrot.slane %v57, %v66
    %vm68 = vcmp.eq.s32.totalorder %v60, %v67
    %vm69 = vcmp.eq.s32.totalorder %v63, %v67
    %v70 = vld [vmem:[%s5] sm:$0x1]
    %v72 = vlaneseq
    %v73 = vshrl.u32 %v72, 7
    %v74 = vsub.s32 0, %v73
    %v75 = vrot.slane %v70, %v74
    %v77 = vsel %vm68, %v75, -18.420681
    %v78 = vsel %vm69, %v75, -18.420681
    %v79 = vlaneseq
    %v80 = vand.u32 %v79, 127
    %v81 = vstv %s38
    %vm82 = vcmp.lt.s32.totalorder %v80, %v81
    %v83 = vsel %vm82, 1, 0
    %v84 = vcvt.s32.f32 %v83
    %v85 = vlaneseq
    %v86 = vshrl.u32 %v85, 7
    %v87 = vadd.s32 %v86, 8
    %v88 = vstv %s39
    %v89 = vadd.s32 %v86, %v88
    %v90 = vadd.s32 %v87, %v88
    %vm91 = vcmp.lt.s32.totalorder %v89, %v81
    %vm92 = vcmp.lt.s32.totalorder %v90, %v81
    %v93 = vsel %vm91, 1, 0
    %v94 = vsel %vm92, 1, 0
    %v95 = vcvt.s32.f32 %v93
    %v96 = vcvt.s32.f32 %v94
    %v99 = vunpack.c.l.b16 %v49
    %v100 = vunpack.c.h.b16 %v49
    %v101 = vunpack.c.l.b16 %v50
    %v102 = vunpack.c.h.b16 %v50
    %v103 = vpack.c.b16 %v101, %v99
    %v104 = vpack.c.b16 %v102, %v100
    %v109 = vunpack.c.l.b16 %v42
    %v110 = vunpack.c.h.b16 %v42
    %v111 = vunpack.c.l.b16 %v43
    %v112 = vunpack.c.h.b16 %v43
    %v113 = vpack.c.b16 %v111, %v109
    %v114 = vpack.c.b16 %v112, %v110
    %117 = vmatprep.subr.bf16.mxu0 %v114
    %118 = vmatpush1.bf16.xpose.msra.mxu0 %v113
    %119 = vmatprep.subr.bf16.mxu0 0
    %120 = vmatpush1.bf16.xpose.msra.mxu0 0
    %121 = vmatprep.subr.bf16.mxu0 0
    %122 = vmatpush1.bf16.xpose.msra.mxu0 0
    %123 = vmatprep.subr.bf16.mxu0 0
    %124 = vmatpush1.bf16.xpose.msra.mxu0 0
    %125 = vmatprep.subr.bf16.mxu0 0
    %126 = vmatpush1.bf16.xpose.msra.mxu0 0
    %127 = vmatprep.subr.bf16.mxu0 0
    %128 = vmatpush1.bf16.xpose.msra.mxu0 0
    %129 = vmatprep.subr.bf16.mxu0 0
    %130 = vmatpush1.bf16.xpose.msra.mxu0 0
    %131 = vmatprep.subr.bf16.mxu0 0
    %132 = vmatpush1.bf16.xpose.msra.mxu0 0
    %133 = vmatprep.subr.bf16.mxu0 0
    %134 = vmatpush1.bf16.xpose.msra.mxu0 0
    %135 = vmatprep.subr.bf16.mxu0 0
    %136 = vmatpush1.bf16.xpose.msra.mxu0 0
    %137 = vmatprep.subr.bf16.mxu0 0
    %138 = vmatpush1.bf16.xpose.msra.mxu0 0
    %139 = vmatprep.subr.bf16.mxu0 0
    %140 = vmatpush1.bf16.xpose.msra.mxu0 0
    %141 = vmatprep.subr.bf16.mxu0 0
    %142 = vmatpush1.bf16.xpose.msra.mxu0 0
    %143 = vmatprep.subr.bf16.mxu0 0
    %144 = vmatpush1.bf16.xpose.msra.mxu0 0
    %145 = vmatprep.subr.bf16.mxu0 0
    %146 = vmatpush1.bf16.xpose.msra.mxu0 0
    %147 = vmatprep.subr.bf16.mxu0 0
    %148 = vmatpush1.bf16.xpose.msra.mxu0 0
    %149 = vmatprep.mubr.bf16.mxu0 %v104
    %150 = vmatmul.mubr.bf16.gmra.mrb[0].mxu0 %v103
    %v151 = vpop.f32.mrb[0].mxu0
    %v152 = vadd.f32 0.0, %v151
    %v153 = vpop.f32.mrb[0].mxu0
    %v154 = vpop.f32.mrb[0].mxu0
    %v155 = vadd.f32 0.0, %v154
    %v156 = vpop.f32.mrb[0].mxu0
    %157 = vdwg.mxu0
    %v160 = vunpack.c.l.b16 %v53
    %v161 = vunpack.c.h.b16 %v53
    %v162 = vunpack.c.l.b16 %v54
    %v163 = vunpack.c.h.b16 %v54
    %v164 = vpack.c.b16 %v162, %v160
    %v165 = vpack.c.b16 %v163, %v161
    %v170 = vunpack.c.l.b16 %v40
    %v171 = vunpack.c.h.b16 %v40
    %v172 = vunpack.c.l.b16 %v41
    %v173 = vunpack.c.h.b16 %v41
    %v174 = vpack.c.b16 %v172, %v170
    %v175 = vpack.c.b16 %v173, %v171
    %178 = vmatprep.subr.bf16.mxu0 %v175
    %179 = vmatpush1.bf16.xpose.msra.mxu0 %v174
    %180 = vmatprep.subr.bf16.mxu0 0
    %181 = vmatpush1.bf16.xpose.msra.mxu0 0
    %182 = vmatprep.subr.bf16.mxu0 0
    %183 = vmatpush1.bf16.xpose.msra.mxu0 0
    %184 = vmatprep.subr.bf16.mxu0 0
    %185 = vmatpush1.bf16.xpose.msra.mxu0 0
    %186 = vmatprep.subr.bf16.mxu0 0
    %187 = vmatpush1.bf16.xpose.msra.mxu0 0
    %188 = vmatprep.subr.bf16.mxu0 0
    %189 = vmatpush1.bf16.xpose.msra.mxu0 0
    %190 = vmatprep.subr.bf16.mxu0 0
    %191 = vmatpush1.bf16.xpose.msra.mxu0 0
    %192 = vmatprep.subr.bf16.mxu0 0
    %193 = vmatpush1.bf16.xpose.msra.mxu0 0
    %194 = vmatprep.subr.bf16.mxu0 0
    %195 = vmatpush1.bf16.xpose.msra.mxu0 0
    %196 = vmatprep.subr.bf16.mxu0 0
    %197 = vmatpush1.bf16.xpose.msra.mxu0 0
    %198 = vmatprep.subr.bf16.mxu0 0
    %199 = vmatpush1.bf16.xpose.msra.mxu0 0
    %200 = vmatprep.subr.bf16.mxu0 0
    %201 = vmatpush1.bf16.xpose.msra.mxu0 0
    %202 = vmatprep.subr.bf16.mxu0 0
    %203 = vmatpush1.bf16.xpose.msra.mxu0 0
    %204 = vmatprep.subr.bf16.mxu0 0
    %205 = vmatpush1.bf16.xpose.msra.mxu0 0
    %206 = vmatprep.subr.bf16.mxu0 0
    %207 = vmatpush1.bf16.xpose.msra.mxu0 0
    %208 = vmatprep.subr.bf16.mxu0 0
    %209 = vmatpush1.bf16.xpose.msra.mxu0 0
    %210 = vmatprep.mubr.bf16.mxu0 %v165
    %211 = vmatmul.mubr.bf16.gmra.mrb[0].mxu0 %v164
    %v212 = vpop.f32.mrb[0].mxu0
    %v213 = vadd.f32 0.0, %v212
    %v214 = vpop.f32.mrb[0].mxu0
    %v215 = vpop.f32.mrb[0].mxu0
    %v216 = vadd.f32 0.0, %v215
    %v217 = vpop.f32.mrb[0].mxu0
    %218 = vdwg.mxu0
    %v219 = vmul.f32 %v152, 50.0
    %v220 = vmul.f32 %v155, 50.0
    %v221 = vmul.f32 %v152, %v152
    %v222 = vmul.f32 %v155, %v155
    %v223 = vsub.f32 1.0, %v221
    %v224 = vsub.f32 1.0, %v222
    %v225 = vmax.f32 %v223, 0.0
    %v226 = vmax.f32 %v224, 0.0
    %v227 = vrsqrt.pop %v225
    %v228 = vmul.f32 %v225, %v227
    %vm229 = vcmp.eq.f32.partialorder %v225, inf
    %v230 = vsel %vm229, %v225, %v228
    %vm231 = vcmp.eq.f32.partialorder %v225, 0.0
    %v232 = vand.u32 %v225, 2147483648
    %v233 = vsel %vm231, %v232, %v230
    %v234 = vrsqrt.pop %v226
    %v235 = vmul.f32 %v226, %v234
    %vm236 = vcmp.eq.f32.partialorder %v226, inf
    %v237 = vsel %vm236, %v226, %v235
    %vm238 = vcmp.eq.f32.partialorder %v226, 0.0
    %v239 = vand.u32 %v226, 2147483648
    %v240 = vsel %vm238, %v239, %v237
    %vm241 = vcmp.gt.f32.partialorder %v152, -0.9800666
    %vm242 = vcmp.gt.f32.partialorder %v155, -0.9800666
    %v243 = vmul.f32 %v219, 0.9800666
    %v244 = vmul.f32 %v220, 0.9800666
    %v245 = vmul.f32 %v233, 9.933467
    %v246 = vmul.f32 %v240, 9.933467
    %v247 = vsub.f32 %v243, %v245
    %v248 = vsub.f32 %v244, %v246
    %v249 = vsub.f32 %v219, 1.9866933
    %v250 = vsub.f32 %v220, 1.9866933
    %v251 = vsel %vm241, %v247, %v249
    %v252 = vsel %vm242, %v248, %v250
    %v253 = vmul.f32 %v219, 1.442695
    %v254 = vpow.pop %v253
    %v255 = vmul.f32 %v220, 1.442695
    %v256 = vpow.pop %v255
    %v257 = vmul.f32 %v254, %v84
    %v258 = vmul.f32 %v256, %v84
    %vm259 = vcmask 130048
    %v260 = vsel %vm259, %v257, 0.0
    %261 = vadd.xlane.f32.xlu0 %v260
    %v262 = vpop.xlane.xlu0 %261
    %v263 = vsel %vm259, %v258, 0.0
    %264 = vadd.xlane.f32.xlu0 %v263
    %v265 = vpop.xlane.xlu0 %264
    %v266 = vsub.f32 %v262, %v257
    %v267 = vsub.f32 %v265, %v258
    %v268 = vmul.f32 %v251, 1.442695
    %v269 = vpow.pop %v268
    %v270 = vmul.f32 %v252, 1.442695
    %v271 = vpow.pop %v270
    %v272 = vadd.f32 %v269, %v266
    %v273 = vadd.f32 %v271, %v267
    %v274 = vlog2.pop %v272
    %v275 = vmul.f32 %v274, 0.6931472
    %v276 = vlog2.pop %v273
    %v277 = vmul.f32 %v276, 0.6931472
    %v278 = vsub.f32 %v251, %v275
    %v279 = vsub.f32 %v252, %v277
    %v280 = vrcp.pop %v272
    %v281 = vrcp.pop %v273
    %v282 = vmul.f32 %v269, %v280
    %v283 = vmul.f32 %v271, %v281
    %v284 = vmul.f32 %v282, %v84
    %v285 = vmul.f32 %v283, %v84
    %v286 = vsel %vm259, %v284, 0.0
    %287 = vadd.xlane.f32.xlu0 %v286
    %v288 = vpop.xlane.xlu0 %287
    %v289 = vsel %vm259, %v285, 0.0
    %290 = vadd.xlane.f32.xlu0 %v289
    %v291 = vpop.xlane.xlu0 %290
    %v292 = vrcp.pop %v288
    %v293 = vrcp.pop %v291
    %v294 = vmul.f32 %v284, %v292
    %v295 = vmul.f32 %v285, %v293
    %v296 = vlog2.pop %v288
    %v297 = vmul.f32 %v296, 0.6931472
    %v298 = vlog2.pop %v291
    %v299 = vmul.f32 %v298, 0.6931472
    %v300 = vsub.f32 %v278, %v297
    %v301 = vsub.f32 %v279, %v299
    %v302 = vsub.f32 %v300, %v77
    %v303 = vsub.f32 %v301, %v78
    %v304 = vmul.f32 %v294, %v302
    %v305 = vmul.f32 %v295, %v303
    %v306 = vmul.f32 %v213, 50.0
    %v307 = vmul.f32 %v216, 50.0
    %v308 = vmul.f32 %v213, %v213
    %v309 = vmul.f32 %v216, %v216
    %v310 = vsub.f32 1.0, %v308
    %v311 = vsub.f32 1.0, %v309
    %v312 = vmax.f32 %v310, 0.0
    %v313 = vmax.f32 %v311, 0.0
    %v314 = vrsqrt.pop %v312
    %v315 = vmul.f32 %v312, %v314
    %vm316 = vcmp.eq.f32.partialorder %v312, inf
    %v317 = vsel %vm316, %v312, %v315
    %vm318 = vcmp.eq.f32.partialorder %v312, 0.0
    %v319 = vand.u32 %v312, 2147483648
    %v320 = vsel %vm318, %v319, %v317
    %v321 = vrsqrt.pop %v313
    %v322 = vmul.f32 %v313, %v321
    %vm323 = vcmp.eq.f32.partialorder %v313, inf
    %v324 = vsel %vm323, %v313, %v322
    %vm325 = vcmp.eq.f32.partialorder %v313, 0.0
    %v326 = vand.u32 %v313, 2147483648
    %v327 = vsel %vm325, %v326, %v324
    %vm328 = vcmp.gt.f32.partialorder %v213, -0.9800666
    %vm329 = vcmp.gt.f32.partialorder %v216, -0.9800666
    %v330 = vmul.f32 %v306, 0.9800666
    %v331 = vmul.f32 %v307, 0.9800666
    %v332 = vmul.f32 %v320, 9.933467
    %v333 = vmul.f32 %v327, 9.933467
    %v334 = vsub.f32 %v330, %v332
    %v335 = vsub.f32 %v331, %v333
    %v336 = vsub.f32 %v306, 1.9866933
    %v337 = vsub.f32 %v307, 1.9866933
    %v338 = vsel %vm328, %v334, %v336
    %v339 = vsel %vm329, %v335, %v337
    %v340 = vmul.f32 %v306, 1.442695
    %v341 = vpow.pop %v340
    %v342 = vmul.f32 %v307, 1.442695
    %v343 = vpow.pop %v342
    %v344 = vmul.f32 %v341, %v84
    %v345 = vmul.f32 %v343, %v84
    %v346 = vsel %vm259, %v344, 0.0
    %347 = vadd.xlane.f32.xlu0 %v346
    %v348 = vpop.xlane.xlu0 %347
    %v349 = vsel %vm259, %v345, 0.0
    %350 = vadd.xlane.f32.xlu0 %v349
    %v351 = vpop.xlane.xlu0 %350
    %v352 = vsub.f32 %v348, %v344
    %v353 = vsub.f32 %v351, %v345
    %v354 = vmul.f32 %v338, 1.442695
    %v355 = vpow.pop %v354
    %v356 = vmul.f32 %v339, 1.442695
    %v357 = vpow.pop %v356
    %v358 = vadd.f32 %v355, %v352
    %v359 = vadd.f32 %v357, %v353
    %v360 = vlog2.pop %v358
    %v361 = vmul.f32 %v360, 0.6931472
    %v362 = vlog2.pop %v359
    %v363 = vmul.f32 %v362, 0.6931472
    %v364 = vsub.f32 %v338, %v361
    %v365 = vsub.f32 %v339, %v363
    %v366 = vrcp.pop %v358
    %v367 = vrcp.pop %v359
    %v368 = vmul.f32 %v355, %v366
    %v369 = vmul.f32 %v357, %v367
    %v370 = vmul.f32 %v368, %v84
    %v371 = vmul.f32 %v369, %v84
    %v372 = vsel %vm259, %v370, 0.0
    %373 = vadd.xlane.f32.xlu0 %v372
    %v374 = vpop.xlane.xlu0 %373
    %v375 = vsel %vm259, %v371, 0.0
    %376 = vadd.xlane.f32.xlu0 %v375
    %v377 = vpop.xlane.xlu0 %376
    %v378 = vrcp.pop %v374
    %v379 = vrcp.pop %v377
    %v380 = vmul.f32 %v370, %v378
    %v381 = vmul.f32 %v371, %v379
    %v382 = vlog2.pop %v374
    %v383 = vmul.f32 %v382, 0.6931472
    %v384 = vlog2.pop %v377
    %v385 = vmul.f32 %v384, 0.6931472
    %v386 = vsub.f32 %v364, %v383
    %v387 = vsub.f32 %v365, %v385
    %v388 = vsub.f32 %v386, %v77
    %v389 = vsub.f32 %v387, %v78
    %v390 = vmul.f32 %v380, %v388
    %v391 = vmul.f32 %v381, %v389
    %v392 = vadd.f32 %v304, %v390
    %v393 = vadd.f32 %v305, %v391
    %v394 = vmul.f32 %v392, %v95
    %v395 = vmul.f32 %v393, %v96
    %v396 = vsel %vm259, %v394, 0.0
    %v397 = vsel %vm259, %v395, 0.0
    %v398 = vadd.f32 %v396, %v397
    %v399 = vrot.slane %v398, 4
    %v400 = vadd.f32 %v398, %v399
    %v401 = vrot.slane %v400, 2
    %v402 = vadd.f32 %v400, %v401
    %v403 = vrot.slane %v402, 1
    %v404 = vadd.f32 %v402, %v403
    %vm405 = vcmask 122880
    %406 = vst.msk [vmem:[#allocation7] sm:$0x1] %vm405, %v404
    // Predicated region
    $region26: #{tpu_custom_call.1} parent=1 // pred_check
      _
    $region27: #{tpu_custom_call.1} parent=1 // pred_check_branch
      %408 = sbr.rel (0) target = $region29
    $region28: #{tpu_custom_call.1} parent=1 // pred_region
      %s410 = ssub.s32 16, 16
      %411 = vsyncadd [#allocation6], %s410
      %s413 = sshll.u32 [#allocation7], 4
      %s414 = int_to_ptr.vmem [resolvable:$true] %s413
      %416 = dma.vmem_to_hbm [thread:$0]  %s414, 16, %s6, [#allocation6]
    $region29: #{tpu_custom_call.1} parent=1 // pred_fallthru
      _
    // Predicated region
    $region30: #{tpu_custom_call.1} parent=1 // pred_check
      _
    $region31: #{tpu_custom_call.1} parent=1 // pred_check_branch
      %418 = sbr.rel (0) target = $region33
    $region32: #{tpu_custom_call.1} parent=1 // pred_region
      %419 = dma.done [#allocation6], 16
    $region33: #{tpu_custom_call.1} parent=1 // pred_fallthru
      _
    %420 = vsyncpa [#allocation5], 1
    %421 = vsyncpa [#allocation6], 1

</llo_original>
